<compile_context>
chip_gen: v7x
topology: tpu7x:2x2x1
jax: 0.10.0
libtpu: 0.0.40
codegen_flags: <defaults>
</compile_context>

<pallas_src>
import functools

import jax
import jax.numpy as jnp
from jax.experimental import pallas as pl
from jax.experimental.pallas import tpu as pltpu


def pred_layer_kernel(x_ref, w_ref, b_ref, y_ref, scores_ref, rowloss_ref,
                      m_sc, l_sc, t_sc):
    j = pl.program_id(1)                      # vocab tile index (reduction axis)
    tn, tv = scores_ref.shape

    @pl.when(j == 0)
    def _():
        m_sc[...] = jnp.full_like(m_sc, -jnp.inf)
        l_sc[...] = jnp.zeros_like(l_sc)
        t_sc[...] = jnp.zeros_like(t_sc)

    # Linear projection tile: bf16 (tn, D) @ bf16 (D, tv) -> f32 MXU accumulation,
    # bias added in f32.
    s = jnp.dot(x_ref[...], w_ref[...],
                preferred_element_type=jnp.float32) + b_ref[...]
    scores_ref[...] = s.astype(scores_ref.dtype)

    # Online logsumexp accumulation across vocab tiles (all f32).
    m_new = jnp.maximum(m_sc[...], s.max(axis=-1, keepdims=True))
    alpha = jnp.exp(m_sc[...] - m_new)
    l_sc[...] = alpha * l_sc[...] + jnp.exp(s - m_new).sum(axis=-1, keepdims=True)
    m_sc[...] = m_new

    # Gather target logits for this vocab tile via one-hot iota mask
    # (VPU/XLU side work; for realistic D the MXU binds and this is free filler).
    col = jax.lax.broadcasted_iota(jnp.int32, (tn, tv), 1) + j * tv
    hit = col == y_ref[...]                   # (tn, tv) vs (tn, 1) -> broadcast
    t_sc[...] += jnp.sum(jnp.where(hit, s, 0.0), axis=-1, keepdims=True)

    @pl.when(j == pl.num_programs(1) - 1)
    def _():
        # Per-row cross entropy: lse - target_logit.  Each token tile writes only
        # its own rows, so the "parallel" N axis stays race-free.
        rowloss_ref[...] = m_sc[...] + jnp.log(l_sc[...]) - t_sc[...]


_TN_PREF = (512, 256, 128, 64, 32, 16)        # multiples of 16 (bf16 sublane packing)
_TV_PREF = (1024, 512, 256, 128)              # lane-dense, MXU-width multiples


def _pick_tile(total, preferred):
    for t in preferred:
        if t <= total and total % t == 0:
            return t
    return total                              # fall back to the full extent


def _vmem_estimate(tn, tv, d):
    """Rough double-buffered working-set size in bytes."""
    bf16, f32, lane = 2, 4, 128
    return (2 * tn * d * bf16                 # x tile
            + 2 * d * tv * bf16               # W vocab tile
            + 2 * tv * f32                    # bias tile
            + 2 * tn * tv * f32               # scores output tile
            + 2 * tn * lane * 4               # targets tile ((tn,1) pads to lane 128)
            + 2 * tn * lane * f32             # per-row loss output (lane-padded)
            + 3 * tn * lane * f32)            # m/l/t scratch (lane-padded)


@functools.partial(jax.jit, static_argnames=("tn", "tv", "vmem_budget"))
def pred_layer_forward(x, w, b, y, *, tn=None, tv=None,
                       vmem_budget=28 * 1024 * 1024):
    """x: (N, D) f32, w: (D, V) f32 (pre-transposed Linear weight), b: (V,), y: (N,) int32."""
    N, D = x.shape
    V = w.shape[1]

    if tn is None:
        tn = _pick_tile(N, _TN_PREF)
    if tv is None:
        tv = _pick_tile(V, _TV_PREF)
    # Shrink tiles until the working set fits a conservative scoped-VMEM budget
    # (safe for v7x's smaller VMEM; v5e/v6e have extra headroom).
    while _vmem_estimate(tn, tv, D) > vmem_budget and tv > 128 and V % (tv // 2) == 0:
        tv //= 2
    while _vmem_estimate(tn, tv, D) > vmem_budget and tn > 16 and N % (tn // 2) == 0:
        tn //= 2
    assert N % tn == 0 and V % tv == 0

    est = _vmem_estimate(tn, tv, D)
    vmem_limit = None
    if est > 16 * 1024 * 1024:                # above the smallest (v5e) default limit
        vmem_limit = int(min(est * 2, 60 * 1024 * 1024))

    # bf16 operands for a single MXU pass + halved W HBM read; f32 accumulation.
    x_bf = x.astype(jnp.bfloat16)
    w_bf = w.astype(jnp.bfloat16)
    b2 = b.reshape(1, V).astype(jnp.float32)
    y2 = y.reshape(N, 1).astype(jnp.int32)

    scores, row_loss = pl.pallas_call(
        pred_layer_kernel,
        out_shape=(jax.ShapeDtypeStruct((N, V), jnp.float32),
                   jax.ShapeDtypeStruct((N, 1), jnp.float32)),
        grid_spec=pltpu.PrefetchScalarGridSpec(
            num_scalar_prefetch=0,
            grid=(N // tn, V // tv),          # N outermost (parallel), vocab innermost
            in_specs=[
                pl.BlockSpec((tn, D), lambda i, j: (i, 0)),    # x tile, resident across j
                pl.BlockSpec((D, tv), lambda i, j: (0, j)),    # W vocab tile
                pl.BlockSpec((1, tv), lambda i, j: (0, j)),    # bias vocab tile
                pl.BlockSpec((tn, 1), lambda i, j: (i, 0)),    # targets tile
            ],
            out_specs=[
                pl.BlockSpec((tn, tv), lambda i, j: (i, j)),   # scores tile
                pl.BlockSpec((tn, 1), lambda i, j: (i, 0)),    # per-row loss
            ],
            scratch_shapes=[
                pltpu.VMEM((tn, 1), jnp.float32),  # running max m
                pltpu.VMEM((tn, 1), jnp.float32),  # running sum l
                pltpu.VMEM((tn, 1), jnp.float32),  # target-logit accumulator
            ],
        ),
        compiler_params=pltpu.CompilerParams(
            dimension_semantics=("parallel", "arbitrary"),
            vmem_limit_bytes=vmem_limit),
    )(x_bf, w_bf, b2, y2)

    loss = jnp.mean(row_loss)                 # reduction='mean' over all tokens
    return scores, loss


if __name__ == "__main__":
    # Small shapes consistent with the module: bsz=2, seq=8 -> N=16 tokens,
    # emb_dim=32, n_words=256, pad_index=0 (targets never equal pad_index).
    N, D, V = 16, 32, 256
    pad_index = 0

    key = jax.random.PRNGKey(0)
    kx, kw, kb, ky = jax.random.split(key, 4)
    x = jax.random.normal(kx, (N, D), dtype=jnp.float32)
    # nn.Linear(dim, n_words) weight is (n_words, dim); we store its transpose (D, V).
    bound = 1.0 / (D ** 0.5)
    w = jax.random.uniform(kw, (D, V), minval=-bound, maxval=bound, dtype=jnp.float32)
    b = jax.random.uniform(kb, (V,), minval=-bound, maxval=bound, dtype=jnp.float32)
    y = jax.random.randint(ky, (N,), 1, V, dtype=jnp.int32)
    assert int(jnp.sum(y == pad_index)) == 0   # module asserts no pad targets

    scores, loss = pred_layer_forward(x, w, b, y)
    jax.block_until_ready((scores, loss))

    # Reference with the same bf16 operand rounding the kernel uses (f32 accumulate).
    xb = x.astype(jnp.bfloat16).astype(jnp.float32)
    wb = w.astype(jnp.bfloat16).astype(jnp.float32)
    ref_scores = xb @ wb + b[None, :]
    ref_lse = jax.scipy.special.logsumexp(ref_scores, axis=-1)
    ref_loss = jnp.mean(ref_lse - ref_scores[jnp.arange(N), y])
    assert jnp.allclose(scores, ref_scores, atol=2e-3, rtol=2e-3)
    assert jnp.allclose(loss, ref_loss, atol=2e-3, rtol=2e-3)

    # Loose check against the full-f32 module semantics (difference is only the
    # bf16 rounding of the matmul operands).
    f32_scores = x @ w + b[None, :]
    f32_loss = jnp.mean(jax.scipy.special.logsumexp(f32_scores, axis=-1)
                        - f32_scores[jnp.arange(N), y])
    assert jnp.allclose(loss, f32_loss, atol=5e-2, rtol=5e-2)

    # TODO(synk): asm=True (AdaptiveLogSoftmaxWithLoss), label_smoothing>0 and
    # unlikelihood branches are not exercised by the default forward path and
    # are not implemented in the kernel.
    print("KERNEL_OK")
</pallas_src>

<mosaic_0001>
module attributes {stable_mosaic.version = 11 : i64} {
  func.func @pred_layer_kernel(%arg0: i32, %arg1: i32, %arg2: memref<16x32xbf16, #tpu.memory_space<vmem>>, %arg3: memref<32x256xbf16, #tpu.memory_space<vmem>>, %arg4: memref<1x256xf32, #tpu.memory_space<vmem>>, %arg5: memref<16x1xi32, #tpu.memory_space<vmem>>, %arg6: memref<16x256xf32, #tpu.memory_space<vmem>>, %arg7: memref<16x1xf32, #tpu.memory_space<vmem>>, %arg8: memref<16x1xf32, #tpu.memory_space<vmem>>, %arg9: memref<16x1xf32, #tpu.memory_space<vmem>>, %arg10: memref<16x1xf32, #tpu.memory_space<vmem>>) attributes {dimension_semantics = [#tpu.dimension_semantics<parallel>, #tpu.dimension_semantics<arbitrary>], iteration_bounds = array<i64: 1, 1>, scalar_prefetch = 0 : i64, scratch_operands = 3 : i64, tpu.core_type = #tpu.core_type<tc>, window_params = [{transform_indices = @transform_0, window_bounds = array<i64: 16, 32>}, {transform_indices = @transform_1, window_bounds = array<i64: 32, 256>}, {transform_indices = @transform_2, window_bounds = array<i64: 1, 256>}, {transform_indices = @transform_3, window_bounds = array<i64: 16, 1>}, {transform_indices = @transform_4, window_bounds = array<i64: 16, 256>}, {transform_indices = @transform_5, window_bounds = array<i64: 16, 1>}]} {
    %c0_i32 = arith.constant 0 : i32
    %0 = arith.cmpi eq, %arg1, %c0_i32 : i32
    %1 = arith.extui %0 : i1 to i32
    %c0_i32_0 = arith.constant 0 : i32
    %2 = arith.cmpi ne, %1, %c0_i32_0 : i32
    scf.if %2 {
      %cst_30 = arith.constant 0xFF800000 : f32
      %44 = vector.broadcast %cst_30 : f32 to vector<16x1xf32>
      %c0_31 = arith.constant 0 : index
      %c0_32 = arith.constant 0 : index
      %45 = vector.load %arg8[%c0_31, %c0_32] : memref<16x1xf32, #tpu.memory_space<vmem>>, vector<16x1xf32>
      tpu.vector_store %arg8[%c0_31, %c0_32], %44 {strides = array<i32>} : memref<16x1xf32, #tpu.memory_space<vmem>>, vector<16x1xf32>,
      %cst_33 = arith.constant 0.000000e+00 : f32
      %46 = vector.broadcast %cst_33 : f32 to vector<16x1xf32>
      %c0_34 = arith.constant 0 : index
      %c0_35 = arith.constant 0 : index
      %47 = vector.load %arg9[%c0_34, %c0_35] : memref<16x1xf32, #tpu.memory_space<vmem>>, vector<16x1xf32>
      tpu.vector_store %arg9[%c0_34, %c0_35], %46 {strides = array<i32>} : memref<16x1xf32, #tpu.memory_space<vmem>>, vector<16x1xf32>,
      %cst_36 = arith.constant 0.000000e+00 : f32
      %48 = vector.broadcast %cst_36 : f32 to vector<16x1xf32>
      %c0_37 = arith.constant 0 : index
      %c0_38 = arith.constant 0 : index
      %49 = vector.load %arg10[%c0_37, %c0_38] : memref<16x1xf32, #tpu.memory_space<vmem>>, vector<16x1xf32>
      tpu.vector_store %arg10[%c0_37, %c0_38], %48 {strides = array<i32>} : memref<16x1xf32, #tpu.memory_space<vmem>>, vector<16x1xf32>,
    } else {
    }
    %c0 = arith.constant 0 : index
    %c0_1 = arith.constant 0 : index
    %3 = vector.load %arg2[%c0, %c0_1] : memref<16x32xbf16, #tpu.memory_space<vmem>>, vector<16x32xbf16>
    %c0_2 = arith.constant 0 : index
    %c0_3 = arith.constant 0 : index
    %4 = vector.load %arg3[%c0_2, %c0_3] : memref<32x256xbf16, #tpu.memory_space<vmem>>, vector<32x256xbf16>
    %cst = arith.constant dense<0.000000e+00> : vector<16x256xf32>
    %5 = tpu.matmul %3, %4, %cst {dimension_numbers = #tpu.dot_dimension_numbers<[1], [0], [0], [1], [0, 0, 1, 1], [], []>} : vector<16x32xbf16>, vector<32x256xbf16>, vector<16x256xf32> -> vector<16x256xf32>
    %c0_4 = arith.constant 0 : index
    %c0_5 = arith.constant 0 : index
    %6 = vector.load %arg4[%c0_4, %c0_5] : memref<1x256xf32, #tpu.memory_space<vmem>>, vector<1x256xf32>
    %7 = vector.broadcast %6 : vector<1x256xf32> to vector<16x256xf32>
    %8 = arith.addf %5, %7 : vector<16x256xf32>
    %c0_6 = arith.constant 0 : index
    %c0_7 = arith.constant 0 : index
    %9 = vector.load %arg6[%c0_6, %c0_7] : memref<16x256xf32, #tpu.memory_space<vmem>>, vector<16x256xf32>
    tpu.vector_store %arg6[%c0_6, %c0_7], %8 {strides = array<i32>} : memref<16x256xf32, #tpu.memory_space<vmem>>, vector<16x256xf32>,
    %c0_8 = arith.constant 0 : index
    %c0_9 = arith.constant 0 : index
    %10 = vector.load %arg8[%c0_8, %c0_9] : memref<16x1xf32, #tpu.memory_space<vmem>>, vector<16x1xf32>
    %cst_10 = arith.constant dense<0xFF800000> : vector<16xf32>
    %11 = vector.multi_reduction <maximumf>, %8, %cst_10 [1] : vector<16x256xf32> to vector<16xf32>
    %12 = vector.shape_cast %11 : vector<16xf32> to vector<16x1xf32>
    %13 = arith.maximumf %10, %12 : vector<16x1xf32>
    %c0_11 = arith.constant 0 : index
    %c0_12 = arith.constant 0 : index
    %14 = vector.load %arg8[%c0_11, %c0_12] : memref<16x1xf32, #tpu.memory_space<vmem>>, vector<16x1xf32>
    %15 = arith.subf %14, %13 : vector<16x1xf32>
    %16 = math.exp %15 : vector<16x1xf32>
    %c0_13 = arith.constant 0 : index
    %c0_14 = arith.constant 0 : index
    %17 = vector.load %arg9[%c0_13, %c0_14] : memref<16x1xf32, #tpu.memory_space<vmem>>, vector<16x1xf32>
    %18 = arith.mulf %16, %17 : vector<16x1xf32>
    %19 = vector.broadcast %13 : vector<16x1xf32> to vector<16x256xf32>
    %20 = arith.subf %8, %19 : vector<16x256xf32>
    %21 = math.exp %20 : vector<16x256xf32>
    %cst_15 = arith.constant dense<0.000000e+00> : vector<16xf32>
    %22 = vector.multi_reduction <add>, %21, %cst_15 [1] : vector<16x256xf32> to vector<16xf32>
    %23 = vector.shape_cast %22 : vector<16xf32> to vector<16x1xf32>
    %24 = arith.addf %18, %23 : vector<16x1xf32>
    %c0_16 = arith.constant 0 : index
    %c0_17 = arith.constant 0 : index
    %25 = vector.load %arg9[%c0_16, %c0_17] : memref<16x1xf32, #tpu.memory_space<vmem>>, vector<16x1xf32>
    tpu.vector_store %arg9[%c0_16, %c0_17], %24 {strides = array<i32>} : memref<16x1xf32, #tpu.memory_space<vmem>>, vector<16x1xf32>,
    %c0_18 = arith.constant 0 : index
    %c0_19 = arith.constant 0 : index
    %26 = vector.load %arg8[%c0_18, %c0_19] : memref<16x1xf32, #tpu.memory_space<vmem>>, vector<16x1xf32>
    tpu.vector_store %arg8[%c0_18, %c0_19], %13 {strides = array<i32>} : memref<16x1xf32, #tpu.memory_space<vmem>>, vector<16x1xf32>,
    %27 = tpu.iota {dimensions = array<i32: 1>} : vector<16x256xi32>
    %c256_i32 = arith.constant 256 : i32
    %28 = arith.muli %arg1, %c256_i32 : i32
    %29 = vector.broadcast %28 : i32 to vector<16x256xi32>
    %30 = arith.addi %27, %29 : vector<16x256xi32>
    %c0_20 = arith.constant 0 : index
    %c0_21 = arith.constant 0 : index
    %31 = vector.load %arg5[%c0_20, %c0_21] : memref<16x1xi32, #tpu.memory_space<vmem>>, vector<16x1xi32>
    %32 = vector.broadcast %31 : vector<16x1xi32> to vector<16x256xi32>
    %33 = arith.cmpi eq, %30, %32 : vector<16x256xi32>
    %c0_22 = arith.constant 0 : index
    %c0_23 = arith.constant 0 : index
    %34 = vector.load %arg10[%c0_22, %c0_23] : memref<16x1xf32, #tpu.memory_space<vmem>>, vector<16x1xf32>
    %cst_24 = arith.constant 0.000000e+00 : f32
    %35 = vector.broadcast %cst_24 : f32 to vector<16x256xf32>
    %36 = arith.select %33, %8, %35 : vector<16x256xi1>, vector<16x256xf32>
    %cst_25 = arith.constant dense<0.000000e+00> : vector<16xf32>
    %37 = vector.multi_reduction <add>, %36, %cst_25 [1] : vector<16x256xf32> to vector<16xf32>
    %38 = vector.shape_cast %37 : vector<16xf32> to vector<16x1xf32>
    %39 = arith.addf %34, %38 : vector<16x1xf32>
    %c0_26 = arith.constant 0 : index
    %c0_27 = arith.constant 0 : index
    %40 = vector.load %arg10[%c0_26, %c0_27] : memref<16x1xf32, #tpu.memory_space<vmem>>, vector<16x1xf32>
    tpu.vector_store %arg10[%c0_26, %c0_27], %39 {strides = array<i32>} : memref<16x1xf32, #tpu.memory_space<vmem>>, vector<16x1xf32>,
    %c0_i32_28 = arith.constant 0 : i32
    %41 = arith.cmpi eq, %arg1, %c0_i32_28 : i32
    %42 = arith.extui %41 : i1 to i32
    %c0_i32_29 = arith.constant 0 : i32
    %43 = arith.cmpi ne, %42, %c0_i32_29 : i32
    scf.if %43 {
      %c0_30 = arith.constant 0 : index
      %c0_31 = arith.constant 0 : index
      %44 = vector.load %arg8[%c0_30, %c0_31] : memref<16x1xf32, #tpu.memory_space<vmem>>, vector<16x1xf32>
      %c0_32 = arith.constant 0 : index
      %c0_33 = arith.constant 0 : index
      %45 = vector.load %arg9[%c0_32, %c0_33] : memref<16x1xf32, #tpu.memory_space<vmem>>, vector<16x1xf32>
      %46 = math.log %45 : vector<16x1xf32>
      %47 = arith.addf %44, %46 : vector<16x1xf32>
      %c0_34 = arith.constant 0 : index
      %c0_35 = arith.constant 0 : index
      %48 = vector.load %arg10[%c0_34, %c0_35] : memref<16x1xf32, #tpu.memory_space<vmem>>, vector<16x1xf32>
      %49 = arith.subf %47, %48 : vector<16x1xf32>
      %c0_36 = arith.constant 0 : index
      %c0_37 = arith.constant 0 : index
      %50 = vector.load %arg7[%c0_36, %c0_37] : memref<16x1xf32, #tpu.memory_space<vmem>>, vector<16x1xf32>
      tpu.vector_store %arg7[%c0_36, %c0_37], %49 {strides = array<i32>} : memref<16x1xf32, #tpu.memory_space<vmem>>, vector<16x1xf32>,
    } else {
    }
    return
  }
  func.func @transform_0(%arg0: i32, %arg1: i32) -> (i32, i32) {
    %c0_i32 = arith.constant 0 : i32
    %c0_i32_0 = arith.constant 0 : i32
    return %arg0, %c0_i32 : i32, i32
  }
  func.func @transform_1(%arg0: i32, %arg1: i32) -> (i32, i32) {
    %c0_i32 = arith.constant 0 : i32
    %c0_i32_0 = arith.constant 0 : i32
    return %c0_i32, %arg1 : i32, i32
  }
  func.func @transform_2(%arg0: i32, %arg1: i32) -> (i32, i32) {
    %c0_i32 = arith.constant 0 : i32
    %c0_i32_0 = arith.constant 0 : i32
    return %c0_i32, %arg1 : i32, i32
  }
  func.func @transform_3(%arg0: i32, %arg1: i32) -> (i32, i32) {
    %c0_i32 = arith.constant 0 : i32
    %c0_i32_0 = arith.constant 0 : i32
    return %arg0, %c0_i32 : i32, i32
  }
  func.func @transform_4(%arg0: i32, %arg1: i32) -> (i32, i32) {
    %c0_i32 = arith.constant 0 : i32
    return %arg0, %arg1 : i32, i32
  }
  func.func @transform_5(%arg0: i32, %arg1: i32) -> (i32, i32) {
    %c0_i32 = arith.constant 0 : i32
    %c0_i32_0 = arith.constant 0 : i32
    return %arg0, %c0_i32 : i32, i32
  }
}

</mosaic_0001>

<llo_original>
// kernel: pred_layer_forward.1
$region0: #{pred_layer_forward.1}
  #allocation0 [shape = 'u32[]', space=smem, size = 0x4, offset = 0x4, fixed_abs, tag = 'smem constant byte address 0x4 - core index']
  #allocation1 [shape = 'u32[144,128]{1,0:T(1,128)}', space=vmem, size = 0x12000, scoped, tag = 'internal scratch']
  #allocation2 [shape = 'f32[16,1]{1,0:T(8,128)}', space=vmem, size = 0x2000, scoped, tag = 'scratch operand']
  #allocation3 [shape = 'f32[16,1]{1,0:T(8,128)}', space=vmem, size = 0x2000, scoped, tag = 'scratch operand']
  #allocation4 [shape = 'f32[16,1]{1,0:T(8,128)}', space=vmem, size = 0x2000, scoped, tag = 'scratch operand']
  %s0 = inlined_call_operand.vmem [shape: bf16[16,32], index: 0, kind: input, shape index: {}]
  %s1 = inlined_call_operand.vmem [shape: bf16[32,256], index: 1, kind: input, shape index: {}]
  %s2 = inlined_call_operand.vmem [shape: f32[1,256], index: 2, kind: input, shape index: {}]
  %s3 = inlined_call_operand.vmem [shape: s32[16,1], index: 3, kind: input, shape index: {}]
  %s4 = inlined_call_operand.hbm [shape: f32[16,256], index: 4, kind: output, shape index: {0}]
  %s5 = inlined_call_operand.vmem [shape: f32[16,1], index: 5, kind: output, shape index: {1}]
  %6 = xla_tuple %s4, %s5
  %s7 = sld [smem:[#allocation0]]
  $region42: #{pred_layer_forward.1} parent=0
    _
  %s9 = ssub.s32 1, %s7
  %s10 = scalar_select 0, %s9, %s7
  $region1: #{pred_layer_forward.1} parent=0
    #allocation5 [shape = 'u8[16384]{0}', space=vmem, size = 0x4000, scoped, tag = 'output window, operand 0, single buffered']
    #allocation6 [shape = 's32[1]{0}', space=sflag, size = 0x4, scoped, tag = 'scoped memory for pred_layer_forward.1']
    %11 = vsyncpa [#allocation6], 0
    // Predicated region
    $region2: #{pred_layer_forward.1} parent=1 // pred_check
      _
    $region3: #{pred_layer_forward.1} parent=1 // pred_check_branch
      %13 = sbr.rel (0) target = $region5
    $region4: #{pred_layer_forward.1} parent=1 // pred_region
      _
    $region5: #{pred_layer_forward.1} parent=1 // pred_fallthru
      _
    // Predicated region
    $region6: #{pred_layer_forward.1} parent=1 // pred_check
      _
    $region7: #{pred_layer_forward.1} parent=1 // pred_check_branch
      %15 = sbr.rel (0) target = $region9
    $region8: #{pred_layer_forward.1} parent=1 // pred_region
      _
    $region9: #{pred_layer_forward.1} parent=1 // pred_fallthru
      _
    // Predicated region
    $region10: #{pred_layer_forward.1} parent=1 // pred_check
      _
    $region11: #{pred_layer_forward.1} parent=1 // pred_check_branch
      %17 = sbr.rel (0) target = $region13
    $region12: #{pred_layer_forward.1} parent=1 // pred_region
      _
    $region13: #{pred_layer_forward.1} parent=1 // pred_fallthru
      _
    // Predicated region
    $region14: #{pred_layer_forward.1} parent=1 // pred_check
      _
    $region15: #{pred_layer_forward.1} parent=1 // pred_check_branch
      %19 = sbr.rel (0) target = $region17
    $region16: #{pred_layer_forward.1} parent=1 // pred_region
      _
    $region17: #{pred_layer_forward.1} parent=1 // pred_fallthru
      _
    %p21 = scmp.eq.s32.totalorder 0, 0
    // Predicated region
    $region18: #{pred_layer_forward.1} parent=1 // pred_check
      %p22 = pneg %p21
    $region19: #{pred_layer_forward.1} parent=1 // pred_check_branch
      %24 = sbr.rel (%p22) target = $region21
    $region20: #{pred_layer_forward.1} parent=1 // pred_region
      %vm25 = vcmask 7168
      %26 = vst.msk [vmem:[#allocation2] sm:$0xff] %vm25, -inf
      %27 = vst.msk [vmem:[#allocation2 + $0x8] sm:$0xff] %vm25, -inf
      %28 = vst.msk [vmem:[#allocation3] sm:$0xff] %vm25, 0.0
      %29 = vst.msk [vmem:[#allocation3 + $0x8] sm:$0xff] %vm25, 0.0
      %30 = vst.msk [vmem:[#allocation4] sm:$0xff] %vm25, 0.0
      %31 = vst.msk [vmem:[#allocation4 + $0x8] sm:$0xff] %vm25, 0.0
    $region21: #{pred_layer_forward.1} parent=1 // pred_fallthru
      _
    %v32 = vld [vmem:[%s0] sm:$0xf]
    %v33 = vld [vmem:[%s0 + $0x4] sm:$0xf]
    %v34 = vld [vmem:[%s1] sm:$0xff]
    %v35 = vld [vmem:[%s1 + $0x8] sm:$0xff]
    %v36 = vld [vmem:[%s1 + $0x10] sm:$0xff]
    %v37 = vld [vmem:[%s1 + $0x18] sm:$0xff]
    %v38 = vld [vmem:[%s2] sm:$0x3]
    %v40 = vlaneseq
    %v41 = vshrl.u32 %v40, 7
    %v42 = vsub.s32 0, %v41
    %v43 = vrot.slane %v38, %v42
    %v44 = vlaneseq
    %v45 = vshrl.u32 %v44, 7
    %v46 = vsub.s32 1, %v45
    %v47 = vrot.slane %v38, %v46
    %v52 = vunpack.c.l.b16 %v32
    %v53 = vunpack.c.l.b16 %v33
    %v54 = vpack.c.b16 %v53, %v52
    %v59 = vunpack.c.l.b16 %v34
    %v60 = vunpack.c.h.b16 %v34
    %v61 = vunpack.c.l.b16 %v35
    %v62 = vunpack.c.h.b16 %v35
    %v63 = vunpack.c.l.b16 %v36
    %v64 = vunpack.c.h.b16 %v36
    %v65 = vunpack.c.l.b16 %v37
    %v66 = vunpack.c.h.b16 %v37
    %v67 = vpack.c.b16 %v61, %v59
    %v68 = vpack.c.b16 %v62, %v60
    %v69 = vpack.c.b16 %v65, %v63
    %v70 = vpack.c.b16 %v66, %v64
    %vm75 = vcmask 261120
    %v77 = vsel %vm75, %v54, 0
    %79 = vmatprep.subr.bf16.mxu0 %v68
    %80 = vmatpush1.bf16.msra.mxu0 %v67
    %81 = vmatprep.subr.bf16.mxu0 %v70
    %82 = vmatpush1.bf16.msra.mxu0 %v69
    %83 = vmatprep.subr.bf16.mxu0 0
    %84 = vmatpush1.bf16.msra.mxu0 0
    %85 = vmatprep.subr.bf16.mxu0 0
    %86 = vmatpush1.bf16.msra.mxu0 0
    %87 = vmatprep.subr.bf16.mxu0 0
    %88 = vmatpush1.bf16.msra.mxu0 0
    %89 = vmatprep.subr.bf16.mxu0 0
    %90 = vmatpush1.bf16.msra.mxu0 0
    %91 = vmatprep.subr.bf16.mxu0 0
    %92 = vmatpush1.bf16.msra.mxu0 0
    %93 = vmatprep.subr.bf16.mxu0 0
    %94 = vmatpush1.bf16.msra.mxu0 0
    %95 = vmatprep.subr.bf16.mxu0 0
    %96 = vmatpush1.bf16.msra.mxu0 0
    %97 = vmatprep.subr.bf16.mxu0 0
    %98 = vmatpush1.bf16.msra.mxu0 0
    %99 = vmatprep.subr.bf16.mxu0 0
    %100 = vmatpush1.bf16.msra.mxu0 0
    %101 = vmatprep.subr.bf16.mxu0 0
    %102 = vmatpush1.bf16.msra.mxu0 0
    %103 = vmatprep.subr.bf16.mxu0 0
    %104 = vmatpush1.bf16.msra.mxu0 0
    %105 = vmatprep.subr.bf16.mxu0 0
    %106 = vmatpush1.bf16.msra.mxu0 0
    %107 = vmatprep.subr.bf16.mxu0 0
    %108 = vmatpush1.bf16.msra.mxu0 0
    %109 = vmatprep.subr.bf16.mxu0 0
    %110 = vmatpush1.bf16.msra.mxu0 0
    %111 = vmatprep.mubr.bf16.mxu0 0
    %112 = vmatmul.mubr.bf16.gmra.mrb[0].mxu0 %v77
    %v113 = vpop.f32.mrb[0].mxu0
    %v114 = vadd.f32 %v43, %v113
    %v115 = vpop.f32.mrb[0].mxu0
    %v116 = vadd.f32 %v47, %v115
    %v117 = vpop.f32.mrb[0].mxu0
    %v118 = vadd.f32 %v43, %v117
    %v119 = vpop.f32.mrb[0].mxu0
    %v120 = vadd.f32 %v47, %v119
    %121 = vdwg.mxu0
    %122 = vst [vmem:[#allocation5] sm:$0xff] %v114
    %123 = vst [vmem:[#allocation5 + $0x8] sm:$0xff] %v116
    %124 = vst [vmem:[#allocation5 + $0x10] sm:$0xff] %v118
    %125 = vst [vmem:[#allocation5 + $0x18] sm:$0xff] %v120
    %v126 = vld [vmem:[#allocation2] sm:$0xff]
    %v127 = vld [vmem:[#allocation2 + $0x8] sm:$0xff]
    %v128 = vmax.f32 %v114, %v116
    %129 = vmax.xlane.f32.xlu0 %v128
    %v130 = vpop.xlane.xlu0 %129
    %v131 = vmax.f32 %v118, %v120
    %132 = vmax.xlane.f32.xlu0 %v131
    %v133 = vpop.xlane.xlu0 %132
    %v134 = vmax.f32 %v126, %v130
    %v135 = vmax.f32 %v127, %v133
    %v136 = vsub.f32 %v126, %v134
    %v137 = vsub.f32 %v127, %v135
    %v138 = vmul.f32 %v136, 1.442695
    %v139 = vpow.pop %v138
    %v140 = vmul.f32 %v137, 1.442695
    %v141 = vpow.pop %v140
    %v142 = vld [vmem:[#allocation3] sm:$0xff]
    %v143 = vld [vmem:[#allocation3 + $0x8] sm:$0xff]
    %v144 = vmul.f32 %v139, %v142
    %v145 = vmul.f32 %v141, %v143
    %147 = vset.pattern.permute.xlu0 0
    %148 = vperm.xlu0 %147, %v134
    %v149 = vpop.permute.xlu0 %148
    %152 = vset.pattern.permute.xlu0 0
    %153 = vperm.xlu0 %152, %v135
    %v154 = vpop.permute.xlu0 %153
    %v156 = vsub.f32 %v114, %v149
    %v157 = vsub.f32 %v116, %v149
    %v158 = vsub.f32 %v118, %v154
    %v159 = vsub.f32 %v120, %v154
    %v160 = vmul.f32 %v156, 1.442695
    %v161 = vpow.pop %v160
    %v162 = vmul.f32 %v157, 1.442695
    %v163 = vpow.pop %v162
    %v164 = vmul.f32 %v158, 1.442695
    %v165 = vpow.pop %v164
    %v166 = vmul.f32 %v159, 1.442695
    %v167 = vpow.pop %v166
    %v168 = vadd.f32 %v161, %v163
    %169 = vadd.xlane.f32.xlu0 %v168
    %v170 = vpop.xlane.xlu0 %169
    %v171 = vadd.f32 %v165, %v167
    %172 = vadd.xlane.f32.xlu0 %v171
    %v173 = vpop.xlane.xlu0 %172
    %v174 = vadd.f32 %v144, %v170
    %v175 = vadd.f32 %v145, %v173
    %vm176 = vcmask 7168
    %177 = vst.msk [vmem:[#allocation3] sm:$0xff] %vm176, %v174
    %178 = vst.msk [vmem:[#allocation3 + $0x8] sm:$0xff] %vm176, %v175
    %179 = vst.msk [vmem:[#allocation2] sm:$0xff] %vm176, %v134
    %180 = vst.msk [vmem:[#allocation2 + $0x8] sm:$0xff] %vm176, %v135
    %v181 = vlaneseq
    %v182 = vand.u32 %v181, 127
    %v183 = vadd.s32 %v182, 128
    %s184 = smul.u32 0, 256
    %v185 = vstv %s184
    %v186 = vadd.s32 %v182, %v185
    %v187 = vadd.s32 %v183, %v185
    %v188 = vld [vmem:[%s3] sm:$0xff]
    %v189 = vld [vmem:[%s3 + $0x8] sm:$0xff]
    %190 = vset.pattern.permute.xlu0 0
    %191 = vperm.xlu0 %190, %v188
    %v192 = vpop.permute.xlu0 %191
    %193 = vset.pattern.permute.xlu0 0
    %194 = vperm.xlu0 %193, %v189
    %v195 = vpop.permute.xlu0 %194
    %vm196 = vcmp.eq.s32.totalorder %v186, %v192
    %vm197 = vcmp.eq.s32.totalorder %v187, %v192
    %vm198 = vcmp.eq.s32.totalorder %v186, %v195
    %vm199 = vcmp.eq.s32.totalorder %v187, %v195
    %v200 = vld [vmem:[#allocation4] sm:$0xff]
    %v201 = vld [vmem:[#allocation4 + $0x8] sm:$0xff]
    %v202 = vsel %vm196, %v114, 0.0
    %v203 = vsel %vm197, %v116, 0.0
    %v204 = vsel %vm198, %v118, 0.0
    %v205 = vsel %vm199, %v120, 0.0
    %v206 = vadd.f32 %v202, %v203
    %207 = vadd.xlane.f32.xlu0 %v206
    %v208 = vpop.xlane.xlu0 %207
    %v209 = vadd.f32 %v204, %v205
    %210 = vadd.xlane.f32.xlu0 %v209
    %v211 = vpop.xlane.xlu0 %210
    %v212 = vadd.f32 %v200, %v208
    %v213 = vadd.f32 %v201, %v211
    %214 = vst.msk [vmem:[#allocation4] sm:$0xff] %vm176, %v212
    %215 = vst.msk [vmem:[#allocation4 + $0x8] sm:$0xff] %vm176, %v213
    // Predicated region
    $region22: #{pred_layer_forward.1} parent=1 // pred_check
      %p216 = pneg %p21
    $region23: #{pred_layer_forward.1} parent=1 // pred_check_branch
      %218 = sbr.rel (%p216) target = $region25
    $region24: #{pred_layer_forward.1} parent=1 // pred_region
      %v219 = vld [vmem:[#allocation2] sm:$0xff]
      %v220 = vld [vmem:[#allocation2 + $0x8] sm:$0xff]
      %v221 = vld [vmem:[#allocation3] sm:$0xff]
      %v222 = vld [vmem:[#allocation3 + $0x8] sm:$0xff]
      %v223 = vlog2.pop %v221
      %v224 = vmul.f32 %v223, 0.6931472
      %v225 = vlog2.pop %v222
      %v226 = vmul.f32 %v225, 0.6931472
      %v227 = vadd.f32 %v219, %v224
      %v228 = vadd.f32 %v220, %v226
      %v229 = vld [vmem:[#allocation4] sm:$0xff]
      %v230 = vld [vmem:[#allocation4 + $0x8] sm:$0xff]
      %v231 = vsub.f32 %v227, %v229
      %v232 = vsub.f32 %v228, %v230
      %233 = vst.msk [vmem:[%s5] sm:$0xff] %vm176, %v231
      %234 = vst.msk [vmem:[%s5 + $0x8] sm:$0xff] %vm176, %v232
    $region25: #{pred_layer_forward.1} parent=1 // pred_fallthru
      _
    // Predicated region
    $region26: #{pred_layer_forward.1} parent=1 // pred_check
      _
    $region27: #{pred_layer_forward.1} parent=1 // pred_check_branch
      %236 = sbr.rel (0) target = $region29
    $region28: #{pred_layer_forward.1} parent=1 // pred_region
      %s238 = ssub.s32 512, 512
      %239 = vsyncadd [#allocation6], %s238
      %s240 = sshll.u32 [#allocation5], 4
      %s241 = int_to_ptr.vmem [resolvable:$true] %s240
      %246 = dma.vmem_to_hbm [thread:$0]  %s241, 512, %s4, [#allocation6], 256, 256, 16
    $region29: #{pred_layer_forward.1} parent=1 // pred_fallthru
      _
    // Predicated region
    $region30: #{pred_layer_forward.1} parent=1 // pred_check
      _
    $region31: #{pred_layer_forward.1} parent=1 // pred_check_branch
      %248 = sbr.rel (0) target = $region33
    $region32: #{pred_layer_forward.1} parent=1 // pred_region
      _
    $region33: #{pred_layer_forward.1} parent=1 // pred_fallthru
      _
    // Predicated region
    $region34: #{pred_layer_forward.1} parent=1 // pred_check
      _
    $region35: #{pred_layer_forward.1} parent=1 // pred_check_branch
      %250 = sbr.rel (0) target = $region37
    $region36: #{pred_layer_forward.1} parent=1 // pred_region
      %251 = dma.done [#allocation6], 512
    $region37: #{pred_layer_forward.1} parent=1 // pred_fallthru
      _
    // Predicated region
    $region38: #{pred_layer_forward.1} parent=1 // pred_check
      _
    $region39: #{pred_layer_forward.1} parent=1 // pred_check_branch
      %253 = sbr.rel (0) target = $region41
    $region40: #{pred_layer_forward.1} parent=1 // pred_region
      _
    $region41: #{pred_layer_forward.1} parent=1 // pred_fallthru
      _
    %254 = vsyncpa [#allocation6], 1

</llo_original>
